<compile_context>
chip_gen: v5e
topology: v5e:2x2
jax: 0.10.0
libtpu: 0.0.40
codegen_flags: <defaults>
</compile_context>

<pallas_src>
import jax
import jax.numpy as jnp
from jax.experimental import pallas as pl
from jax.experimental.pallas import tpu as pltpu

LANE = 128          # TPU lane width -- feature dims padded to this inside the kernel
SUBLANE = 8         # f32 sublane count -- batch tiles are multiples of this
MAX_TILE_B = 1024   # batch-tile cap (per-step overhead amortized, VMEM tiny)
SPLIT_MIN_B = 256   # batches >= this get >= 2 grid tiles (v7x megacore)
PALLAS_MIN_B = 256  # below this the fused XLA path beats kernel launch cost


def _round_up(n, m):
    return (n + m - 1) // m * m


def _choose_tiling(batch):
    """Pick (tile_b, n_tiles). >=2 tiles for large batches, <8 rows waste/tile."""
    b8 = _round_up(batch, SUBLANE)
    if b8 < SPLIT_MIN_B:
        return b8, 1
    n_tiles = max(2, -(-b8 // MAX_TILE_B))
    tile_b = _round_up(-(-b8 // n_tiles), SUBLANE)
    return tile_b, n_tiles


# -----------------------------------------------------------------------------
# Kernel: whole MLP forward on one natural-width batch tile.
#   x_ref: (tile_b, n_in) f32      w_ref: (3, 128, 128) bf16
#   b_ref: (3, 1, 128)   f32       o_ref: (tile_b, n_out) f32
#   xp_ref: (tile_b, 128) f32 VMEM scratch (lane-padded copy of x)
# Padded weight rows/cols and padded bias lanes are zero, so padded lanes stay
# exactly zero through every layer (the scratch is zeroed first: fresh VMEM may
# hold NaNs and NaN * 0 != 0).
# -----------------------------------------------------------------------------
def mlp_kernel(x_ref, w_ref, b_ref, o_ref, xp_ref):
    n_in = x_ref.shape[1]
    n_out = o_ref.shape[1]

    # Widen the natural-width input tile to the 128-lane MXU tile inside VMEM.
    xp_ref[...] = jnp.zeros_like(xp_ref)
    xp_ref[:, :n_in] = x_ref[...]
    x = xp_ref[...].astype(jnp.bfloat16)        # bf16 MXU feed, f32 accumulate

    # input layer + ReLU
    h = jnp.dot(x, w_ref[0], preferred_element_type=jnp.float32) + b_ref[0]
    h = jnp.maximum(h, 0.0)

    # hidden layer + ReLU  (num_hidden_layers=1, the module default)
    h = jnp.dot(h.astype(jnp.bfloat16), w_ref[1],
                preferred_element_type=jnp.float32) + b_ref[1]
    h = jnp.maximum(h, 0.0)

    # output layer (no activation); store only the live columns (natural width)
    out = jnp.dot(h.astype(jnp.bfloat16), w_ref[2],
                  preferred_element_type=jnp.float32) + b_ref[2]
    o_ref[...] = out[:, :n_out]


# -----------------------------------------------------------------------------
# Parameter packing (hoist this: call once, reuse across forwards).
# -----------------------------------------------------------------------------
def pack_params(params):
    def pad_w(w):
        return jnp.zeros((LANE, LANE), jnp.bfloat16).at[
            :w.shape[0], :w.shape[1]].set(w.astype(jnp.bfloat16))

    def pad_b(b):
        b = b.reshape(-1)
        return jnp.zeros((1, LANE), jnp.float32).at[0, :b.shape[0]].set(
            b.astype(jnp.float32))

    w_packed = jnp.stack([pad_w(params["w_in"]), pad_w(params["w_h"]),
                          pad_w(params["w_out"])])            # (3,128,128) bf16
    b_packed = jnp.stack([pad_b(params["b_in"]), pad_b(params["b_h"]),
                          pad_b(params["b_out"])])            # (3,1,128) f32
    return w_packed, b_packed


def _pallas_forward(x, w_packed, b_packed, n_out):
    B, n_in = x.shape
    tile_b, n_tiles = _choose_tiling(B)
    b_pad = tile_b * n_tiles

    x32 = x.astype(jnp.float32)
    if b_pad != B:                       # batch-dim pad only (n_in stays natural)
        x32 = jnp.pad(x32, ((0, b_pad - B), (0, 0)))

    flops = 2 * b_pad * LANE * LANE * 3
    bytes_accessed = int(x32.size * 4 + w_packed.size * 2 + b_packed.size * 4
                         + b_pad * n_out * 4)

    out_padded = pl.pallas_call(
        mlp_kernel,
        out_shape=jax.ShapeDtypeStruct((b_pad, n_out), jnp.float32),
        grid_spec=pltpu.PrefetchScalarGridSpec(
            num_scalar_prefetch=0,
            grid=(n_tiles,),
            in_specs=[
                # natural-width input block (last dim == full array dim)
                pl.BlockSpec((tile_b, n_in), lambda i: (i, 0)),
                # weights/biases: constant block index -> stay VMEM-resident
                pl.BlockSpec((3, LANE, LANE), lambda i: (0, 0, 0)),
                pl.BlockSpec((3, 1, LANE), lambda i: (0, 0, 0)),
            ],
            out_specs=pl.BlockSpec((tile_b, n_out), lambda i: (i, 0)),
            scratch_shapes=[pltpu.VMEM((tile_b, LANE), jnp.float32)],
        ),
        compiler_params=pltpu.CompilerParams(
            dimension_semantics=("parallel",)),
        cost_estimate=pl.CostEstimate(
            flops=flops, transcendentals=0, bytes_accessed=bytes_accessed),
    )(x32, w_packed, b_packed)

    return out_padded if b_pad == B else out_padded[:B]


def _xla_forward(x, params):
    h = jnp.maximum(x @ params["w_in"] + params["b_in"], 0.0)
    h = jnp.maximum(h @ params["w_h"] + params["b_h"], 0.0)
    return h @ params["w_out"] + params["b_out"]


def generic_nn_forward(x, params, packed=None, *, use_pallas=None):
    """x: [B, n_in]; params: weights [in, out], biases [1, out]."""
    B = x.shape[0]
    n_in, n_hid = params["w_in"].shape
    n_out = params["w_out"].shape[1]
    assert params["w_h"].shape == (n_hid, n_hid)
    assert params["w_out"].shape == (n_hid, n_out)
    assert x.shape[1] == n_in
    assert max(n_in, n_hid, n_out) <= LANE, "feature dims must fit one lane tile"

    if use_pallas is None:
        use_pallas = B >= PALLAS_MIN_B       # tiny batches: fused XLA path wins
    if not use_pallas:
        return _xla_forward(x, params)

    if packed is None:                       # callers should hoist pack_params()
        packed = pack_params(params)
    w_packed, b_packed = packed
    return _pallas_forward(x, w_packed, b_packed, n_out)


# -----------------------------------------------------------------------------
# Deterministic parameter init (mimics nn.Linear's U(-1/sqrt(fan_in), +))
# -----------------------------------------------------------------------------
def init_params(key, num_in=10, num_hidden=20, num_out=10):
    def linear(key, fan_in, fan_out):
        kw, kb = jax.random.split(key)
        bound = 1.0 / (fan_in ** 0.5)
        w = jax.random.uniform(kw, (fan_in, fan_out), jnp.float32, -bound, bound)
        b = jax.random.uniform(kb, (1, fan_out), jnp.float32, -bound, bound)
        return w, b

    k1, k2, k3 = jax.random.split(key, 3)
    w_in, b_in = linear(k1, num_in, num_hidden)
    w_h, b_h = linear(k2, num_hidden, num_hidden)
    w_out, b_out = linear(k3, num_hidden, num_out)
    return {"w_in": w_in, "b_in": b_in,
            "w_h": w_h, "b_h": b_h,
            "w_out": w_out, "b_out": b_out}


def reference_forward_f32(x, p):
    h = jnp.maximum(x @ p["w_in"] + p["b_in"], 0.0)
    h = jnp.maximum(h @ p["w_h"] + p["b_h"], 0.0)
    return h @ p["w_out"] + p["b_out"]


def reference_forward_bf16(x, p):
    """Same bf16-in / f32-accumulate dtype path as the kernel."""
    def lin(h, w, b):
        return jnp.dot(h.astype(jnp.bfloat16), w.astype(jnp.bfloat16),
                       preferred_element_type=jnp.float32) + b
    h = jnp.maximum(lin(x, p["w_in"], p["b_in"]), 0.0)
    h = jnp.maximum(lin(h, p["w_h"], p["b_h"]), 0.0)
    return lin(h, p["w_out"], p["b_out"])


if __name__ == "__main__":
    key = jax.random.PRNGKey(0)
    kx, kp, kx2 = jax.random.split(key, 3)

    num_input_features = 10
    num_hidden_features = 20
    num_output_features = 10

    params = init_params(kp, num_input_features, num_hidden_features,
                         num_output_features)
    packed = pack_params(params)   # hoisted: packed once, reused per forward

    fwd = jax.jit(generic_nn_forward, static_argnames=("use_pallas",))

    # Toy batch (module-scale shapes); force the Pallas path to exercise the kernel.
    batch = 8
    x = jax.random.normal(kx, (batch, num_input_features), jnp.float32)
    out = jax.block_until_ready(fwd(x, params, packed, use_pallas=True))
    assert out.shape == (batch, num_output_features)
    assert jnp.allclose(out, reference_forward_bf16(x, params),
                        atol=1e-4, rtol=1e-4)
    assert jnp.allclose(out, reference_forward_f32(x, params),
                        atol=5e-2, rtol=5e-2)

    # Larger batch: exercises the multi-tile ("parallel") grid + batch padding.
    batch2 = 1000
    x2 = jax.random.normal(kx2, (batch2, num_input_features), jnp.float32)
    out2 = jax.block_until_ready(fwd(x2, params, packed, use_pallas=True))
    assert out2.shape == (batch2, num_output_features)
    assert jnp.allclose(out2, reference_forward_bf16(x2, params),
                        atol=1e-4, rtol=1e-4)

    print("KERNEL_OK")
</pallas_src>

<mosaic_0001>
module attributes {stable_mosaic.version = 11 : i64} {
  func.func @mlp_kernel(%arg0: i32, %arg1: memref<8x10xf32, #tpu.memory_space<vmem>>, %arg2: memref<3x128x128xbf16, #tpu.memory_space<vmem>>, %arg3: memref<3x1x128xf32, #tpu.memory_space<vmem>>, %arg4: memref<8x10xf32, #tpu.memory_space<vmem>>, %arg5: memref<8x128xf32, #tpu.memory_space<vmem>>) attributes {dimension_semantics = [#tpu.dimension_semantics<parallel>], iteration_bounds = array<i64: 1>, scalar_prefetch = 0 : i64, scratch_operands = 1 : i64, tpu.core_type = #tpu.core_type<tc>, window_params = [{transform_indices = @transform_0, window_bounds = array<i64: 8, 10>}, {pipeline_mode = #tpu.pipeline_mode<synchronous>, transform_indices = @transform_1, window_bounds = array<i64: 3, 128, 128>}, {pipeline_mode = #tpu.pipeline_mode<synchronous>, transform_indices = @transform_2, window_bounds = array<i64: 3, 1, 128>}, {transform_indices = @transform_3, window_bounds = array<i64: 8, 10>}]} {
    %cst = arith.constant 0.000000e+00 : f32
    %0 = vector.broadcast %cst : f32 to vector<8x128xf32>
    %c0 = arith.constant 0 : index
    %c0_0 = arith.constant 0 : index
    %1 = vector.load %arg5[%c0, %c0_0] : memref<8x128xf32, #tpu.memory_space<vmem>>, vector<8x128xf32>
    tpu.vector_store %arg5[%c0, %c0_0], %0 {strides = array<i32>} : memref<8x128xf32, #tpu.memory_space<vmem>>, vector<8x128xf32>,
    %c0_1 = arith.constant 0 : index
    %c0_2 = arith.constant 0 : index
    %2 = vector.load %arg1[%c0_1, %c0_2] : memref<8x10xf32, #tpu.memory_space<vmem>>, vector<8x10xf32>
    %c0_3 = arith.constant 0 : index
    %c0_4 = arith.constant 0 : index
    %3 = vector.load %arg5[%c0_3, %c0_4] : memref<8x128xf32, #tpu.memory_space<vmem>>, vector<8x10xf32>
    tpu.vector_store %arg5[%c0_3, %c0_4], %2 {strides = array<i32>} : memref<8x128xf32, #tpu.memory_space<vmem>>, vector<8x10xf32>,
    %c0_5 = arith.constant 0 : index
    %c0_6 = arith.constant 0 : index
    %4 = vector.load %arg5[%c0_5, %c0_6] : memref<8x128xf32, #tpu.memory_space<vmem>>, vector<8x128xf32>
    %5 = arith.truncf %4 : vector<8x128xf32> to vector<8x128xbf16>
    %c0_7 = arith.constant 0 : index
    %c0_8 = arith.constant 0 : index
    %c0_9 = arith.constant 0 : index
    %6 = vector.load %arg2[%c0_7, %c0_8, %c0_9] : memref<3x128x128xbf16, #tpu.memory_space<vmem>>, vector<1x128x128xbf16>
    %7 = vector.shape_cast %6 : vector<1x128x128xbf16> to vector<128x128xbf16>
    %cst_10 = arith.constant dense<0.000000e+00> : vector<8x128xf32>
    %8 = tpu.matmul %5, %7, %cst_10 {dimension_numbers = #tpu.dot_dimension_numbers<[1], [0], [0], [1], [0, 0, 1, 1], [], []>} : vector<8x128xbf16>, vector<128x128xbf16>, vector<8x128xf32> -> vector<8x128xf32>
    %c0_11 = arith.constant 0 : index
    %c0_12 = arith.constant 0 : index
    %c0_13 = arith.constant 0 : index
    %9 = vector.load %arg3[%c0_11, %c0_12, %c0_13] : memref<3x1x128xf32, #tpu.memory_space<vmem>>, vector<1x1x128xf32>
    %10 = vector.shape_cast %9 : vector<1x1x128xf32> to vector<1x128xf32>
    %11 = vector.broadcast %10 : vector<1x128xf32> to vector<8x128xf32>
    %12 = arith.addf %8, %11 : vector<8x128xf32>
    %cst_14 = arith.constant 0.000000e+00 : f32
    %13 = vector.broadcast %cst_14 : f32 to vector<8x128xf32>
    %14 = arith.maximumf %12, %13 : vector<8x128xf32>
    %15 = arith.truncf %14 : vector<8x128xf32> to vector<8x128xbf16>
    %c1 = arith.constant 1 : index
    %c0_15 = arith.constant 0 : index
    %c0_16 = arith.constant 0 : index
    %16 = vector.load %arg2[%c1, %c0_15, %c0_16] : memref<3x128x128xbf16, #tpu.memory_space<vmem>>, vector<1x128x128xbf16>
    %17 = vector.shape_cast %16 : vector<1x128x128xbf16> to vector<128x128xbf16>
    %cst_17 = arith.constant dense<0.000000e+00> : vector<8x128xf32>
    %18 = tpu.matmul %15, %17, %cst_17 {dimension_numbers = #tpu.dot_dimension_numbers<[1], [0], [0], [1], [0, 0, 1, 1], [], []>} : vector<8x128xbf16>, vector<128x128xbf16>, vector<8x128xf32> -> vector<8x128xf32>
    %c1_18 = arith.constant 1 : index
    %c0_19 = arith.constant 0 : index
    %c0_20 = arith.constant 0 : index
    %19 = vector.load %arg3[%c1_18, %c0_19, %c0_20] : memref<3x1x128xf32, #tpu.memory_space<vmem>>, vector<1x1x128xf32>
    %20 = vector.shape_cast %19 : vector<1x1x128xf32> to vector<1x128xf32>
    %21 = vector.broadcast %20 : vector<1x128xf32> to vector<8x128xf32>
    %22 = arith.addf %18, %21 : vector<8x128xf32>
    %cst_21 = arith.constant 0.000000e+00 : f32
    %23 = vector.broadcast %cst_21 : f32 to vector<8x128xf32>
    %24 = arith.maximumf %22, %23 : vector<8x128xf32>
    %25 = arith.truncf %24 : vector<8x128xf32> to vector<8x128xbf16>
    %c2 = arith.constant 2 : index
    %c0_22 = arith.constant 0 : index
    %c0_23 = arith.constant 0 : index
    %26 = vector.load %arg2[%c2, %c0_22, %c0_23] : memref<3x128x128xbf16, #tpu.memory_space<vmem>>, vector<1x128x128xbf16>
    %27 = vector.shape_cast %26 : vector<1x128x128xbf16> to vector<128x128xbf16>
    %cst_24 = arith.constant dense<0.000000e+00> : vector<8x128xf32>
    %28 = tpu.matmul %25, %27, %cst_24 {dimension_numbers = #tpu.dot_dimension_numbers<[1], [0], [0], [1], [0, 0, 1, 1], [], []>} : vector<8x128xbf16>, vector<128x128xbf16>, vector<8x128xf32> -> vector<8x128xf32>
    %c2_25 = arith.constant 2 : index
    %c0_26 = arith.constant 0 : index
    %c0_27 = arith.constant 0 : index
    %29 = vector.load %arg3[%c2_25, %c0_26, %c0_27] : memref<3x1x128xf32, #tpu.memory_space<vmem>>, vector<1x1x128xf32>
    %30 = vector.shape_cast %29 : vector<1x1x128xf32> to vector<1x128xf32>
    %31 = vector.broadcast %30 : vector<1x128xf32> to vector<8x128xf32>
    %32 = arith.addf %28, %31 : vector<8x128xf32>
    %33 = vector.extract_strided_slice %32 {offsets = [0, 0], sizes = [8, 10], strides = [1, 1]} : vector<8x128xf32> to vector<8x10xf32>
    %c0_28 = arith.constant 0 : index
    %c0_29 = arith.constant 0 : index
    %34 = vector.load %arg4[%c0_28, %c0_29] : memref<8x10xf32, #tpu.memory_space<vmem>>, vector<8x10xf32>
    tpu.vector_store %arg4[%c0_28, %c0_29], %33 {strides = array<i32>} : memref<8x10xf32, #tpu.memory_space<vmem>>, vector<8x10xf32>,
    return
  }
  func.func @transform_0(%arg0: i32) -> (i32, i32) {
    %c0_i32 = arith.constant 0 : i32
    %c0_i32_0 = arith.constant 0 : i32
    return %arg0, %c0_i32 : i32, i32
  }
  func.func @transform_1(%arg0: i32) -> (i32, i32, i32) {
    %c0_i32 = arith.constant 0 : i32
    %c0_i32_0 = arith.constant 0 : i32
    %c0_i32_1 = arith.constant 0 : i32
    %c0_i32_2 = arith.constant 0 : i32
    return %c0_i32, %c0_i32_0, %c0_i32_1 : i32, i32, i32
  }
  func.func @transform_2(%arg0: i32) -> (i32, i32, i32) {
    %c0_i32 = arith.constant 0 : i32
    %c0_i32_0 = arith.constant 0 : i32
    %c0_i32_1 = arith.constant 0 : i32
    %c0_i32_2 = arith.constant 0 : i32
    return %c0_i32, %c0_i32_0, %c0_i32_1 : i32, i32, i32
  }
  func.func @transform_3(%arg0: i32) -> (i32, i32) {
    %c0_i32 = arith.constant 0 : i32
    %c0_i32_0 = arith.constant 0 : i32
    return %arg0, %c0_i32 : i32, i32
  }
}

</mosaic_0001>

<llo_original>
// kernel: generic_nn_forward.1
$region0: #{generic_nn_forward.1}
  #allocation0 [shape = 'u32[]', space=smem, size = 0x4, offset = 0x4, fixed_abs, tag = 'smem constant byte address 0x4 - core index']
  #allocation1 [shape = 'u32[72,128]{1,0:T(1,128)}', space=vmem, size = 0x9000, scoped, tag = 'internal scratch']
  #allocation2 [shape = 'f32[8,128]{1,0:T(8,128)}', space=vmem, size = 0x1000, scoped, tag = 'scratch operand']
  %s0 = inlined_call_operand.hbm [shape: f32[8,10], index: 0, kind: input, shape index: {}]
  %s1 = inlined_call_operand.hbm [shape: bf16[3,128,128], index: 1, kind: input, shape index: {}]
  %s2 = inlined_call_operand.hbm [shape: f32[3,1,128], index: 2, kind: input, shape index: {}]
  %s3 = inlined_call_operand.hbm [shape: f32[8,10], index: 3, kind: output, shape index: {}]
  %s4 = sld [smem:[#allocation0]]
  $region34: #{generic_nn_forward.1} parent=0
    _
  %s6 = ssub.s32 1, %s4
  %s7 = scalar_select 0, %s6, %s4
  $region1: #{generic_nn_forward.1} parent=0
    #allocation3 [shape = 'u8[4096]{0}', space=vmem, size = 0x1000, scoped, tag = 'input window, operand 0, single buffered']
    #allocation4 [shape = 's32[1]{0}', space=sflag, size = 0x4, scoped, tag = 'scoped memory for generic_nn_forward.1']
    #allocation5 [shape = 's32[1]{0}', space=sflag, size = 0x4, scoped, tag = 'scoped memory for generic_nn_forward.1']
    #allocation6 [shape = 'u8[98304]{0}', space=vmem, size = 0x18000, scoped, tag = 'input window, operand 1, single buffered']
    #allocation7 [shape = 's32[1]{0}', space=sflag, size = 0x4, scoped, tag = 'scoped memory for generic_nn_forward.1']
    #allocation8 [shape = 'u8[1536]{0}', space=vmem, size = 0x800, scoped, tag = 'input window, operand 2, single buffered']
    #allocation9 [shape = 'u8[4096]{0}', space=vmem, size = 0x1000, scoped, tag = 'output window, operand 0, single buffered']
    %8 = vsyncpa [#allocation4], 0
    %9 = vsyncpa [#allocation7], 0
    %10 = vsyncpa [#allocation5], 0
    // Predicated region
    $region2: #{generic_nn_forward.1} parent=1 // pred_check
      _
    $region3: #{generic_nn_forward.1} parent=1 // pred_check_branch
      %12 = sbr.rel (0) target = $region5
    $region4: #{generic_nn_forward.1} parent=1 // pred_region
      %14 = vsyncadd [#allocation4], 0
      %s16 = sshll.u32 %s0, 4
      %s17 = int_to_ptr.hbm [resolvable:$true] %s16
      %s18 = sshll.u32 [#allocation3], 4
      %s19 = int_to_ptr.vmem [resolvable:$true] %s18
      %21 = dma.hbm_to_vmem [thread:$0]  %s17, 128, %s19, [#allocation4]
    $region5: #{generic_nn_forward.1} parent=1 // pred_fallthru
      _
    // Predicated region
    $region6: #{generic_nn_forward.1} parent=1 // pred_check
      _
    $region7: #{generic_nn_forward.1} parent=1 // pred_check_branch
      %23 = sbr.rel (0) target = $region9
    $region8: #{generic_nn_forward.1} parent=1 // pred_region
      %25 = vsyncadd [#allocation7], 0
      %s26 = sshll.u32 %s1, 4
      %s27 = int_to_ptr.hbm [resolvable:$true] %s26
      %s28 = sshll.u32 [#allocation6], 4
      %s29 = int_to_ptr.vmem [resolvable:$true] %s28
      %34 = dma.hbm_to_vmem [thread:$0]  %s27, 3072, %s29, [#allocation7], 64, 64, 4
    $region9: #{generic_nn_forward.1} parent=1 // pred_fallthru
      _
    // Predicated region
    $region10: #{generic_nn_forward.1} parent=1 // pred_check
      _
    $region11: #{generic_nn_forward.1} parent=1 // pred_check_branch
      %36 = sbr.rel (0) target = $region13
    $region12: #{generic_nn_forward.1} parent=1 // pred_region
      %38 = vsyncadd [#allocation7], 0
      %s39 = sshll.u32 %s2, 4
      %s40 = int_to_ptr.hbm [resolvable:$true] %s39
      %s41 = sshll.u32 [#allocation8], 4
      %s42 = int_to_ptr.vmem [resolvable:$true] %s41
      %47 = dma.hbm_to_vmem [thread:$0]  %s40, 48, %s42, [#allocation7], 16, 16, 1
    $region13: #{generic_nn_forward.1} parent=1 // pred_fallthru
      _
    // Predicated region
    $region14: #{generic_nn_forward.1} parent=1 // pred_check
      _
    $region15: #{generic_nn_forward.1} parent=1 // pred_check_branch
      %49 = sbr.rel (0) target = $region17
    $region16: #{generic_nn_forward.1} parent=1 // pred_region
      %51 = dma.done [#allocation4], 128
    $region17: #{generic_nn_forward.1} parent=1 // pred_fallthru
      _
    // Predicated region
    $region18: #{generic_nn_forward.1} parent=1 // pred_check
      _
    $region19: #{generic_nn_forward.1} parent=1 // pred_check_branch
      %53 = sbr.rel (0) target = $region21
    $region20: #{generic_nn_forward.1} parent=1 // pred_region
      %55 = dma.done [#allocation7], 3072
    $region21: #{generic_nn_forward.1} parent=1 // pred_fallthru
      _
    // Predicated region
    $region22: #{generic_nn_forward.1} parent=1 // pred_check
      _
    $region23: #{generic_nn_forward.1} parent=1 // pred_check_branch
      %57 = sbr.rel (0) target = $region25
    $region24: #{generic_nn_forward.1} parent=1 // pred_region
      %59 = dma.done [#allocation7], 48
    $region25: #{generic_nn_forward.1} parent=1 // pred_fallthru
      _
    %60 = vst [vmem:[#allocation2] sm:$0xff] 0.0
    %v61 = vld [vmem:[#allocation3] sm:$0xff]
    %vm62 = vcmask 80896
    %63 = vst.msk [vmem:[#allocation2] sm:$0xff] %vm62, %v61
    %v64 = vld [vmem:[#allocation2] sm:$0xff]
    %v65 = vpack.c.bf16 %v64, %v64
    %v66 = vld [vmem:[#allocation6] sm:$0xf]
    %v67 = vld [vmem:[#allocation6 + $0x4] sm:$0xf]
    %v68 = vld [vmem:[#allocation6 + $0x8] sm:$0xf]
    %v69 = vld [vmem:[#allocation6 + $0xc] sm:$0xf]
    %v70 = vld [vmem:[#allocation6 + $0x10] sm:$0xf]
    %v71 = vld [vmem:[#allocation6 + $0x14] sm:$0xf]
    %v72 = vld [vmem:[#allocation6 + $0x18] sm:$0xf]
    %v73 = vld [vmem:[#allocation6 + $0x1c] sm:$0xf]
    %v74 = vld [vmem:[#allocation6 + $0x20] sm:$0xf]
    %v75 = vld [vmem:[#allocation6 + $0x24] sm:$0xf]
    %v76 = vld [vmem:[#allocation6 + $0x28] sm:$0xf]
    %v77 = vld [vmem:[#allocation6 + $0x2c] sm:$0xf]
    %v78 = vld [vmem:[#allocation6 + $0x30] sm:$0xf]
    %v79 = vld [vmem:[#allocation6 + $0x34] sm:$0xf]
    %v80 = vld [vmem:[#allocation6 + $0x38] sm:$0xf]
    %v81 = vld [vmem:[#allocation6 + $0x3c] sm:$0xf]
    %v82 = vld [vmem:[#allocation8] sm:$0x1]
    %v84 = vperm.slane %v82, 0
    %v102 = vunpack.c.l.b16 %v66
    %v103 = vunpack.c.l.b16 %v67
    %v104 = vunpack.c.l.b16 %v68
    %v105 = vunpack.c.l.b16 %v69
    %v106 = vunpack.c.l.b16 %v70
    %v107 = vunpack.c.l.b16 %v71
    %v108 = vunpack.c.l.b16 %v72
    %v109 = vunpack.c.l.b16 %v73
    %v110 = vunpack.c.l.b16 %v74
    %v111 = vunpack.c.l.b16 %v75
    %v112 = vunpack.c.l.b16 %v76
    %v113 = vunpack.c.l.b16 %v77
    %v114 = vunpack.c.l.b16 %v78
    %v115 = vunpack.c.l.b16 %v79
    %v116 = vunpack.c.l.b16 %v80
    %v117 = vunpack.c.l.b16 %v81
    %v118 = vpack.c.b16 %v103, %v102
    %v119 = vpack.c.b16 %v105, %v104
    %v120 = vpack.c.b16 %v107, %v106
    %v121 = vpack.c.b16 %v109, %v108
    %v122 = vpack.c.b16 %v111, %v110
    %v123 = vpack.c.b16 %v113, %v112
    %v124 = vpack.c.b16 %v115, %v114
    %v125 = vpack.c.b16 %v117, %v116
    %134 = vmatpush.bf16.msra.mxu0 %v125
    %135 = vmatpush.bf16.msra.mxu0 %v124
    %136 = vmatpush.bf16.msra.mxu0 %v123
    %137 = vmatpush.bf16.msra.mxu0 %v122
    %138 = vmatpush.bf16.msra.mxu0 %v121
    %139 = vmatpush.bf16.msra.mxu0 %v120
    %140 = vmatpush.bf16.msra.mxu0 %v119
    %141 = vmatpush.bf16.msra.mxu0 %v118
    %142 = vmatmul.bf16.gmra.mxu0 %v65
    %v143 = vpop.f32.mrf.mxu0
    %v144 = vadd.f32 %v84, %v143
    %v145 = vpop.f32.mrf.mxu0
    %146 = vdwg.mxu0
    %v147 = vmax.f32 %v144, 0.0
    %v148 = vpack.c.bf16 %v147, %v147
    %s149 = scalar_lea.vmem [#allocation6], 64
    %v150 = vld [vmem:[%s149] sm:$0xf]
    %v151 = vld [vmem:[%s149 + $0x4] sm:$0xf]
    %v152 = vld [vmem:[%s149 + $0x8] sm:$0xf]
    %v153 = vld [vmem:[%s149 + $0xc] sm:$0xf]
    %v154 = vld [vmem:[%s149 + $0x10] sm:$0xf]
    %v155 = vld [vmem:[%s149 + $0x14] sm:$0xf]
    %v156 = vld [vmem:[%s149 + $0x18] sm:$0xf]
    %v157 = vld [vmem:[%s149 + $0x1c] sm:$0xf]
    %v158 = vld [vmem:[%s149 + $0x20] sm:$0xf]
    %v159 = vld [vmem:[%s149 + $0x24] sm:$0xf]
    %v160 = vld [vmem:[%s149 + $0x28] sm:$0xf]
    %v161 = vld [vmem:[%s149 + $0x2c] sm:$0xf]
    %v162 = vld [vmem:[%s149 + $0x30] sm:$0xf]
    %v163 = vld [vmem:[%s149 + $0x34] sm:$0xf]
    %v164 = vld [vmem:[%s149 + $0x38] sm:$0xf]
    %v165 = vld [vmem:[%s149 + $0x3c] sm:$0xf]
    %s166 = scalar_lea.vmem [#allocation8], 1
    %v167 = vld [vmem:[%s166] sm:$0x1]
    %v169 = vperm.slane %v167, 0
    %v187 = vunpack.c.l.b16 %v150
    %v188 = vunpack.c.l.b16 %v151
    %v189 = vunpack.c.l.b16 %v152
    %v190 = vunpack.c.l.b16 %v153
    %v191 = vunpack.c.l.b16 %v154
    %v192 = vunpack.c.l.b16 %v155
    %v193 = vunpack.c.l.b16 %v156
    %v194 = vunpack.c.l.b16 %v157
    %v195 = vunpack.c.l.b16 %v158
    %v196 = vunpack.c.l.b16 %v159
    %v197 = vunpack.c.l.b16 %v160
    %v198 = vunpack.c.l.b16 %v161
    %v199 = vunpack.c.l.b16 %v162
    %v200 = vunpack.c.l.b16 %v163
    %v201 = vunpack.c.l.b16 %v164
    %v202 = vunpack.c.l.b16 %v165
    %v203 = vpack.c.b16 %v188, %v187
    %v204 = vpack.c.b16 %v190, %v189
    %v205 = vpack.c.b16 %v192, %v191
    %v206 = vpack.c.b16 %v194, %v193
    %v207 = vpack.c.b16 %v196, %v195
    %v208 = vpack.c.b16 %v198, %v197
    %v209 = vpack.c.b16 %v200, %v199
    %v210 = vpack.c.b16 %v202, %v201
    %219 = vmatpush.bf16.msra.mxu0 %v210
    %220 = vmatpush.bf16.msra.mxu0 %v209
    %221 = vmatpush.bf16.msra.mxu0 %v208
    %222 = vmatpush.bf16.msra.mxu0 %v207
    %223 = vmatpush.bf16.msra.mxu0 %v206
    %224 = vmatpush.bf16.msra.mxu0 %v205
    %225 = vmatpush.bf16.msra.mxu0 %v204
    %226 = vmatpush.bf16.msra.mxu0 %v203
    %227 = vmatmul.bf16.gmra.mxu0 %v148
    %v228 = vpop.f32.mrf.mxu0
    %v229 = vadd.f32 %v169, %v228
    %v230 = vpop.f32.mrf.mxu0
    %231 = vdwg.mxu0
    %v232 = vmax.f32 %v229, 0.0
    %v233 = vpack.c.bf16 %v232, %v232
    %s234 = scalar_lea.vmem [#allocation6], 128
    %v235 = vld [vmem:[%s234] sm:$0xf]
    %v236 = vld [vmem:[%s234 + $0x4] sm:$0xf]
    %v237 = vld [vmem:[%s234 + $0x8] sm:$0xf]
    %v238 = vld [vmem:[%s234 + $0xc] sm:$0xf]
    %v239 = vld [vmem:[%s234 + $0x10] sm:$0xf]
    %v240 = vld [vmem:[%s234 + $0x14] sm:$0xf]
    %v241 = vld [vmem:[%s234 + $0x18] sm:$0xf]
    %v242 = vld [vmem:[%s234 + $0x1c] sm:$0xf]
    %v243 = vld [vmem:[%s234 + $0x20] sm:$0xf]
    %v244 = vld [vmem:[%s234 + $0x24] sm:$0xf]
    %v245 = vld [vmem:[%s234 + $0x28] sm:$0xf]
    %v246 = vld [vmem:[%s234 + $0x2c] sm:$0xf]
    %v247 = vld [vmem:[%s234 + $0x30] sm:$0xf]
    %v248 = vld [vmem:[%s234 + $0x34] sm:$0xf]
    %v249 = vld [vmem:[%s234 + $0x38] sm:$0xf]
    %v250 = vld [vmem:[%s234 + $0x3c] sm:$0xf]
    %s251 = scalar_lea.vmem [#allocation8], 2
    %v252 = vld [vmem:[%s251] sm:$0x1]
    %v254 = vperm.slane %v252, 0
    %v272 = vunpack.c.l.b16 %v235
    %v273 = vunpack.c.l.b16 %v236
    %v274 = vunpack.c.l.b16 %v237
    %v275 = vunpack.c.l.b16 %v238
    %v276 = vunpack.c.l.b16 %v239
    %v277 = vunpack.c.l.b16 %v240
    %v278 = vunpack.c.l.b16 %v241
    %v279 = vunpack.c.l.b16 %v242
    %v280 = vunpack.c.l.b16 %v243
    %v281 = vunpack.c.l.b16 %v244
    %v282 = vunpack.c.l.b16 %v245
    %v283 = vunpack.c.l.b16 %v246
    %v284 = vunpack.c.l.b16 %v247
    %v285 = vunpack.c.l.b16 %v248
    %v286 = vunpack.c.l.b16 %v249
    %v287 = vunpack.c.l.b16 %v250
    %v288 = vpack.c.b16 %v273, %v272
    %v289 = vpack.c.b16 %v275, %v274
    %v290 = vpack.c.b16 %v277, %v276
    %v291 = vpack.c.b16 %v279, %v278
    %v292 = vpack.c.b16 %v281, %v280
    %v293 = vpack.c.b16 %v283, %v282
    %v294 = vpack.c.b16 %v285, %v284
    %v295 = vpack.c.b16 %v287, %v286
    %304 = vmatpush.bf16.msra.mxu0 %v295
    %305 = vmatpush.bf16.msra.mxu0 %v294
    %306 = vmatpush.bf16.msra.mxu0 %v293
    %307 = vmatpush.bf16.msra.mxu0 %v292
    %308 = vmatpush.bf16.msra.mxu0 %v291
    %309 = vmatpush.bf16.msra.mxu0 %v290
    %310 = vmatpush.bf16.msra.mxu0 %v289
    %311 = vmatpush.bf16.msra.mxu0 %v288
    %312 = vmatmul.bf16.gmra.mxu0 %v233
    %v313 = vpop.f32.mrf.mxu0
    %v314 = vadd.f32 %v254, %v313
    %v315 = vpop.f32.mrf.mxu0
    %316 = vdwg.mxu0
    %317 = vst.msk [vmem:[#allocation9] sm:$0xff] %vm62, %v314
    // Predicated region
    $region26: #{generic_nn_forward.1} parent=1 // pred_check
      _
    $region27: #{generic_nn_forward.1} parent=1 // pred_check_branch
      %319 = sbr.rel (0) target = $region29
    $region28: #{generic_nn_forward.1} parent=1 // pred_region
      %321 = vsyncadd [#allocation5], 0
      %s323 = sshll.u32 [#allocation9], 4
      %s324 = int_to_ptr.vmem [resolvable:$true] %s323
      %s325 = sshll.u32 %s3, 4
      %s326 = int_to_ptr.hbm [resolvable:$true] %s325
      %328 = dma.vmem_to_hbm [thread:$0]  %s324, 128, %s326, [#allocation5]
    $region29: #{generic_nn_forward.1} parent=1 // pred_fallthru
      _
    // Predicated region
    $region30: #{generic_nn_forward.1} parent=1 // pred_check
      _
    $region31: #{generic_nn_forward.1} parent=1 // pred_check_branch
      %330 = sbr.rel (0) target = $region33
    $region32: #{generic_nn_forward.1} parent=1 // pred_region
      %332 = dma.done [#allocation5], 128
    $region33: #{generic_nn_forward.1} parent=1 // pred_fallthru
      _
    %333 = vsyncpa [#allocation4], 1
    %334 = vsyncpa [#allocation7], 1
    %335 = vsyncpa [#allocation5], 1

</llo_original>
